<compile_context>
chip_gen: v7x
topology: tpu7x:2x2x1
jax: 0.10.0
libtpu: 0.0.40
codegen_flags: <defaults>
</compile_context>

<pallas_src>
import functools

import jax
import jax.numpy as jnp
from jax.experimental import pallas as pl
from jax.experimental.pallas import tpu as pltpu


_DEFAULT_SCOPED_VMEM = 32 * 1024 * 1024  # default scoped VMEM limit (v6e/v7x)


def _round_up(n, m):
    return ((n + m - 1) // m) * m


# --------------------------------------------------------------------------- #
# One-time parameter fusion (hoisted out of the per-call path).
# --------------------------------------------------------------------------- #
def prepare_gated_trans_params(wy, by, wg, bg, *, compute_dtype=jnp.bfloat16):
    """Fuse the two linears once: pad out_dim->128k, K->128k, concat, cast.

    wy/wg: (in_dim, out_dim) f32, by/bg: (1, out_dim) f32.
    Returns (w_cat bf16 (in_pad, 2*out_pad), b_cat f32 (1, 2*out_pad),
             in_dim, in_pad, out_dim, out_pad).
    """
    in_dim, out_dim = wy.shape
    out_pad = _round_up(out_dim, 128)   # lane-dense output / aligned branch split
    in_pad = _round_up(in_dim, 128)     # full MXU K tiles, clean bf16 layout

    if out_pad != out_dim:
        pad = out_pad - out_dim
        wy = jnp.pad(wy, ((0, 0), (0, pad)))
        wg = jnp.pad(wg, ((0, 0), (0, pad)))
        by = jnp.pad(by, ((0, 0), (0, pad)))
        bg = jnp.pad(bg, ((0, 0), (0, pad)))
    if in_pad != in_dim:
        wy = jnp.pad(wy, ((0, in_pad - in_dim), (0, 0)))
        wg = jnp.pad(wg, ((0, in_pad - in_dim), (0, 0)))

    w_cat = jnp.concatenate([wy, wg], axis=1).astype(compute_dtype)
    b_cat = jnp.concatenate([by, bg], axis=1).astype(jnp.float32)
    return w_cat, b_cat, in_dim, in_pad, out_dim, out_pad


# --------------------------------------------------------------------------- #
# Kernel
# --------------------------------------------------------------------------- #
def gated_trans_kernel(x_ref, w_ref, b_ref, o_ref, *, out_pad, compute_dtype):
    # x_ref: (tm, in_pad) input dtype   w_ref: (in_pad, 2*out_pad) bf16 (resident)
    # b_ref: (1, 2*out_pad) f32         o_ref: (tm, out_pad)
    x = x_ref[...].astype(compute_dtype)          # in-kernel cast (VPU, free vs HBM)

    # One fused MXU matmul for both branches, f32 accumulation.
    acc = jnp.dot(x, w_ref[...], preferred_element_type=jnp.float32)
    acc = acc + b_ref[...]                        # f32 epilogue (bias broadcast)

    y_lin = acc[:, :out_pad]                      # tanh branch (lane-aligned split)
    g_lin = acc[:, out_pad:]                      # leaky branch

    y = jnp.tanh(y_lin)                           # EUP
    g = jnp.maximum(g_lin, 0.01 * g_lin)          # LeakyReLU, single VPU max

    o_ref[...] = (y * g).astype(o_ref.dtype)


# --------------------------------------------------------------------------- #
# Tiling / VMEM helpers
# --------------------------------------------------------------------------- #
def _pick_tm(B, cap=1024):
    """Pick a batch tile: multiple of 128, even grid length when B > 128."""
    if B <= 128:
        return B                       # single full-extent block
    k = 1
    while _round_up(-(-B // (2 * k)), 128) > cap:
        k += 1
    return min(_round_up(-(-B // (2 * k)), 128), _round_up(B, 128))


def _vmem_footprint_bytes(tm, in_pad, out_pad, x_bytes, out_bytes):
    # Conservative: assume everything (incl. the constant-index W) is 2x buffered.
    x_buf = 2 * tm * in_pad * x_bytes
    o_buf = 2 * tm * out_pad * out_bytes
    w_buf = 2 * in_pad * (2 * out_pad) * 2        # bf16 fused weight
    b_buf = 2 * (2 * out_pad) * 4                 # f32 fused bias
    return x_buf + o_buf + w_buf + b_buf


# --------------------------------------------------------------------------- #
# Wrapper
# --------------------------------------------------------------------------- #
def gated_trans(x, fused_params, *, tm=None, out_dtype=None,
                compute_dtype=jnp.bfloat16, return_padded=False):
    """x: (B, in_dim). fused_params: output of prepare_gated_trans_params."""
    w_cat, b_cat, in_dim, in_pad, out_dim, out_pad = fused_params
    B, x_in_dim = x.shape
    assert x_in_dim == in_dim, "x feature dim does not match prepared params"
    out_dtype = x.dtype if out_dtype is None else out_dtype

    # K padding of x only if the feature dim is unaligned (weights already padded
    # with zeros at init, so this is numerically a no-op).
    if in_pad != in_dim:
        x = jnp.pad(x, ((0, 0), (0, in_pad - in_dim)))

    # Batch tile: even grid (>= 2) when B > 128 so v7x megacore gets both TCs;
    # multiple of 128 for full MXU rows / unmasked f32 stores on v5e.
    if tm is None:
        tm = _pick_tm(B)
    else:
        tm = B if tm >= B else max(128, (tm // 128) * 128)
    grid = (pl.cdiv(B, tm),)

    # Only raise the scoped VMEM limit if the real footprint actually needs it.
    need = int(1.25 * _vmem_footprint_bytes(
        tm, in_pad, out_pad, jnp.dtype(x.dtype).itemsize, jnp.dtype(out_dtype).itemsize))
    cp_kwargs = dict(dimension_semantics=("parallel",))
    if need > _DEFAULT_SCOPED_VMEM:
        cp_kwargs["vmem_limit_bytes"] = need

    kernel = functools.partial(gated_trans_kernel, out_pad=out_pad,
                               compute_dtype=compute_dtype)

    out = pl.pallas_call(
        kernel,
        out_shape=jax.ShapeDtypeStruct((B, out_pad), out_dtype),
        grid_spec=pltpu.PrefetchScalarGridSpec(
            num_scalar_prefetch=0,
            grid=grid,
            in_specs=[
                pl.BlockSpec((tm, in_pad), lambda i: (i, 0)),           # x tile (streams)
                pl.BlockSpec((in_pad, 2 * out_pad), lambda i: (0, 0)),  # fused W (resident)
                pl.BlockSpec((1, 2 * out_pad), lambda i: (0, 0)),       # fused bias (resident)
            ],
            out_specs=pl.BlockSpec((tm, out_pad), lambda i: (i, 0)),
        ),
        compiler_params=pltpu.CompilerParams(**cp_kwargs),
    )(x, w_cat, b_cat)

    # Consumers that tolerate the lane padding can skip this extra read/write pass.
    if out_pad != out_dim and not return_padded:
        out = out[:, :out_dim]
    return out


# --------------------------------------------------------------------------- #
# Reference + demo
# --------------------------------------------------------------------------- #
def kaiming_uniform(key, fan_in, shape, dtype=jnp.float32):
    # Mimics nn.init.kaiming_uniform_ defaults (bound = sqrt(6/fan_in)).
    bound = jnp.sqrt(6.0 / fan_in)
    return jax.random.uniform(key, shape, dtype=dtype, minval=-bound, maxval=bound)


def gated_trans_ref(x, wy, by, wg, bg, compute_dtype=jnp.bfloat16):
    # Reference applies the same bf16 cast on x/W as the kernel (f32 accumulation).
    xc = x.astype(compute_dtype).astype(jnp.float32)
    wyc = wy.astype(compute_dtype).astype(jnp.float32)
    wgc = wg.astype(compute_dtype).astype(jnp.float32)
    y = jnp.tanh(xc @ wyc + by)
    g_lin = xc @ wgc + bg
    g = jnp.where(g_lin >= 0, g_lin, 0.01 * g_lin)
    return (y * g).astype(x.dtype)


if __name__ == "__main__":
    key = jax.random.PRNGKey(0)
    # Small, lane-friendly shapes (visdial-style GatedTrans: in_dim~256-512 -> out_dim~128-512).
    B, in_dim, out_dim = 256, 256, 128

    kx, kwy, kwg, kby, kbg = jax.random.split(key, 5)
    x = jax.random.normal(kx, (B, in_dim), dtype=jnp.float32)

    # PyTorch Linear weight is (out_dim, in_dim) with fan_in = in_dim; we store the
    # transpose (in_dim, out_dim) for direct x @ W. Module inits bias to 0; use small
    # non-zero biases here purely to exercise the bias-add path.
    wy = kaiming_uniform(kwy, in_dim, (in_dim, out_dim))
    wg = kaiming_uniform(kwg, in_dim, (in_dim, out_dim))
    by = 0.1 * jax.random.normal(kby, (1, out_dim), dtype=jnp.float32)
    bg = 0.1 * jax.random.normal(kbg, (1, out_dim), dtype=jnp.float32)

    # One-time fusion (would live in module init / parameter packing).
    fused = prepare_gated_trans_params(wy, by, wg, bg)

    out = gated_trans(x, fused)          # tm auto -> 128, grid = (2,): even, pipelined
    out = jax.block_until_ready(out)

    ref = gated_trans_ref(x, wy, by, wg, bg)
    assert out.shape == (B, out_dim)
    max_err = float(jnp.max(jnp.abs(out - ref)))
    assert jnp.allclose(out, ref, atol=2e-3, rtol=2e-3), \
        f"mismatch vs JAX reference (max abs err {max_err})"

    print("KERNEL_OK")
</pallas_src>

<mosaic_0001>
module attributes {stable_mosaic.version = 11 : i64} {
  func.func @gated_trans_kernel(%arg0: i32, %arg1: memref<128x256xf32, #tpu.memory_space<vmem>>, %arg2: memref<256x256xbf16, #tpu.memory_space<vmem>>, %arg3: memref<1x256xf32, #tpu.memory_space<vmem>>, %arg4: memref<128x128xf32, #tpu.memory_space<vmem>>) attributes {dimension_semantics = [#tpu.dimension_semantics<parallel>], iteration_bounds = array<i64: 2>, scalar_prefetch = 0 : i64, scratch_operands = 0 : i64, tpu.core_type = #tpu.core_type<tc>, window_params = [{transform_indices = @transform_0, window_bounds = array<i64: 128, 256>}, {pipeline_mode = #tpu.pipeline_mode<synchronous>, transform_indices = @transform_1, window_bounds = array<i64: 256, 256>}, {pipeline_mode = #tpu.pipeline_mode<synchronous>, transform_indices = @transform_2, window_bounds = array<i64: 1, 256>}, {transform_indices = @transform_3, window_bounds = array<i64: 128, 128>}]} {
    %c0 = arith.constant 0 : index
    %c0_0 = arith.constant 0 : index
    %0 = vector.load %arg1[%c0, %c0_0] : memref<128x256xf32, #tpu.memory_space<vmem>>, vector<128x256xf32>
    %1 = arith.truncf %0 : vector<128x256xf32> to vector<128x256xbf16>
    %c0_1 = arith.constant 0 : index
    %c0_2 = arith.constant 0 : index
    %2 = vector.load %arg2[%c0_1, %c0_2] : memref<256x256xbf16, #tpu.memory_space<vmem>>, vector<256x256xbf16>
    %cst = arith.constant dense<0.000000e+00> : vector<128x256xf32>
    %3 = tpu.matmul %1, %2, %cst {dimension_numbers = #tpu.dot_dimension_numbers<[1], [0], [0], [1], [0, 0, 1, 1], [], []>} : vector<128x256xbf16>, vector<256x256xbf16>, vector<128x256xf32> -> vector<128x256xf32>
    %c0_3 = arith.constant 0 : index
    %c0_4 = arith.constant 0 : index
    %4 = vector.load %arg3[%c0_3, %c0_4] : memref<1x256xf32, #tpu.memory_space<vmem>>, vector<1x256xf32>
    %5 = vector.broadcast %4 : vector<1x256xf32> to vector<128x256xf32>
    %6 = arith.addf %3, %5 : vector<128x256xf32>
    %7 = vector.extract_strided_slice %6 {offsets = [0, 0], sizes = [128, 128], strides = [1, 1]} : vector<128x256xf32> to vector<128x128xf32>
    %8 = vector.extract_strided_slice %6 {offsets = [0, 128], sizes = [128, 128], strides = [1, 1]} : vector<128x256xf32> to vector<128x128xf32>
    %9 = math.tanh %7 : vector<128x128xf32>
    %cst_5 = arith.constant 0.00999999977 : f32
    %10 = vector.broadcast %cst_5 : f32 to vector<128x128xf32>
    %11 = arith.mulf %10, %8 : vector<128x128xf32>
    %12 = arith.maximumf %8, %11 : vector<128x128xf32>
    %13 = arith.mulf %9, %12 : vector<128x128xf32>
    %c0_6 = arith.constant 0 : index
    %c0_7 = arith.constant 0 : index
    %14 = vector.load %arg4[%c0_6, %c0_7] : memref<128x128xf32, #tpu.memory_space<vmem>>, vector<128x128xf32>
    tpu.vector_store %arg4[%c0_6, %c0_7], %13 {strides = array<i32>} : memref<128x128xf32, #tpu.memory_space<vmem>>, vector<128x128xf32>,
    return
  }
  func.func @transform_0(%arg0: i32) -> (i32, i32) {
    %c0_i32 = arith.constant 0 : i32
    %c0_i32_0 = arith.constant 0 : i32
    return %arg0, %c0_i32 : i32, i32
  }
  func.func @transform_1(%arg0: i32) -> (i32, i32) {
    %c0_i32 = arith.constant 0 : i32
    %c0_i32_0 = arith.constant 0 : i32
    %c0_i32_1 = arith.constant 0 : i32
    return %c0_i32, %c0_i32_0 : i32, i32
  }
  func.func @transform_2(%arg0: i32) -> (i32, i32) {
    %c0_i32 = arith.constant 0 : i32
    %c0_i32_0 = arith.constant 0 : i32
    %c0_i32_1 = arith.constant 0 : i32
    return %c0_i32, %c0_i32_0 : i32, i32
  }
  func.func @transform_3(%arg0: i32) -> (i32, i32) {
    %c0_i32 = arith.constant 0 : i32
    %c0_i32_0 = arith.constant 0 : i32
    return %arg0, %c0_i32 : i32, i32
  }
}

</mosaic_0001>

<llo_original>
// kernel: tpu_custom_call.1
$region0: #{tpu_custom_call.1}
  #allocation0 [shape = 'u32[]', space=smem, size = 0x4, offset = 0x4, fixed_abs, tag = 'smem constant byte address 0x4 - core index']
  #allocation1 [shape = 'u32[144,128]{1,0:T(1,128)}', space=vmem, size = 0x12000, scoped, tag = 'internal scratch']
  %s0 = inlined_call_operand.hbm [shape: f32[256,256], index: 0, kind: input, shape index: {}]
  %s1 = inlined_call_operand.hbm [shape: bf16[256,256], index: 1, kind: input, shape index: {}]
  %s2 = inlined_call_operand.vmem [shape: f32[1,256], index: 2, kind: input, shape index: {}]
  %s3 = inlined_call_operand.hbm [shape: f32[256,128], index: 3, kind: output, shape index: {}]
  %s4 = sld [smem:[#allocation0]]
  $region53: #{tpu_custom_call.1} parent=0
    _
  %s6 = ssub.s32 1, %s4
  %s7 = scalar_select 0, %s6, %s4
  $region1: #{tpu_custom_call.1} parent=0
    #allocation2 [shape = 'u8[262144]{0}', space=vmem, size = 0x40000, scoped, tag = 'input window, operand 0']
    #allocation3 [shape = 's32[2]{0}', space=sflag, size = 0x8, scoped, tag = 'scoped memory for tpu_custom_call.1']
    #allocation4 [shape = 's32[2]{0}', space=sflag, size = 0x8, scoped, tag = 'scoped memory for tpu_custom_call.1']
    #allocation5 [shape = 'u8[131072]{0}', space=vmem, size = 0x20000, scoped, tag = 'input window, operand 1, single buffered']
    #allocation6 [shape = 's32[1]{0}', space=sflag, size = 0x4, scoped, tag = 'scoped memory for tpu_custom_call.1']
    #allocation7 [shape = 'u8[131072]{0}', space=vmem, size = 0x20000, scoped, tag = 'output window, operand 0']
    %8 = vsyncpa [#allocation3], 0
    %s9 = scalar_lea.sflag [#allocation3], 1
    %10 = vsyncpa %s9, 0
    %11 = vsyncpa [#allocation6], 0
    %12 = vsyncpa [#allocation4], 0
    %s13 = scalar_lea.sflag [#allocation4], 1
    %14 = vsyncpa %s13, 0
    loop: start=0, step=1, limit=4
    $region2: #{tpu_custom_call.1} parent=1 // loop_pre_header
      _
    $region3: #{tpu_custom_call.1} parent=1 // loop_header
      %s16 = sphi 0, %s20
      %p17 = scmp.ge.s32.totalorder %s16, 4
      %s26 = sphi 0, %s28
      %s29 = sphi 0, %s26
      %s30 = sphi 0, %s29
      %s46 = sphi 0, %s30
      %s50 = sphi 0, %s50
      %s52 = sphi 0, %s50
      %s53 = sphi 0, %s52
      %s67 = sphi 0, %s53
      %s71 = sphi 0, %s71
      %s73 = sphi 0, %s71
      %s74 = sphi 0, %s73
      %s88 = sphi 0, %s74
      %s94 = sphi 0, %s96
      %s97 = sphi 0, %s94
      %s98 = sphi 0, %s97
      %s114 = sphi 0, %s98
    $region4: #{tpu_custom_call.1} parent=1 // loop_header_branch
      %19 = sbr.rel (%p17) target = $region8
    $region5: #{tpu_custom_call.1} parent=1 // loop_body
      %s21 = ssub.s32 %s16, 1
      %s22 = ssub.s32 %s16, 2
      %s23 = sadd.s32 %s16, 1
      %s24 = ssub.s32 %s16, %s23
      %p25 = scmp.eq.s32.totalorder %s24, 0
      %s27 = sadd.s32 %s26, 1
      %s28 = scalar_select %p25, %s26, %s27
      %p31 = pneg %p25
      %p32 = scmp.eq.s32.totalorder %s16, 1
      %p33 = por %p31, %p32
      %p34 = scmp.ne.s32.totalorder %s26, %s29
      %p35 = scmp.eq.s32.totalorder %s16, 0
      %p36 = por %p34, %p35
      %p37 = scmp.ne.s32.totalorder %s26, %s29
      %p38 = scmp.eq.s32.totalorder %s21, 1
      %p39 = por %p37, %p38
      %p40 = scmp.ne.s32.totalorder %s29, %s30
      %p41 = scmp.eq.s32.totalorder %s21, 0
      %p42 = por %p40, %p41
      %p43 = scmp.ne.s32.totalorder %s29, %s30
      %p44 = scmp.eq.s32.totalorder %s22, 1
      %p45 = por %p43, %p44
      %p47 = scmp.ne.s32.totalorder %s30, %s46
      %p48 = scmp.eq.s32.totalorder %s22, 0
      %p49 = por %p47, %p48
      %s51 = sadd.s32 %s50, 1
      %p54 = scmp.eq.s32.totalorder %s16, 1
      %p55 = scmp.ne.s32.totalorder %s50, %s52
      %p56 = scmp.eq.s32.totalorder %s16, 0
      %p57 = por %p55, %p56
      %p58 = scmp.ne.s32.totalorder %s50, %s52
      %p59 = scmp.eq.s32.totalorder %s21, 1
      %p60 = por %p58, %p59
      %p61 = scmp.ne.s32.totalorder %s52, %s53
      %p62 = scmp.eq.s32.totalorder %s21, 0
      %p63 = por %p61, %p62
      %p64 = scmp.ne.s32.totalorder %s52, %s53
      %p65 = scmp.eq.s32.totalorder %s22, 1
      %p66 = por %p64, %p65
      %p68 = scmp.ne.s32.totalorder %s53, %s67
      %p69 = scmp.eq.s32.totalorder %s22, 0
      %p70 = por %p68, %p69
      %s72 = sadd.s32 %s71, 1
      %p75 = scmp.eq.s32.totalorder %s16, 1
      %p76 = scmp.ne.s32.totalorder %s71, %s73
      %p77 = scmp.eq.s32.totalorder %s16, 0
      %p78 = por %p76, %p77
      %p79 = scmp.ne.s32.totalorder %s71, %s73
      %p80 = scmp.eq.s32.totalorder %s21, 1
      %p81 = por %p79, %p80
      %p82 = scmp.ne.s32.totalorder %s73, %s74
      %p83 = scmp.eq.s32.totalorder %s21, 0
      %p84 = por %p82, %p83
      %p85 = scmp.ne.s32.totalorder %s73, %s74
      %p86 = scmp.eq.s32.totalorder %s22, 1
      %p87 = por %p85, %p86
      %p89 = scmp.ne.s32.totalorder %s74, %s88
      %p90 = scmp.eq.s32.totalorder %s22, 0
      %p91 = por %p89, %p90
      %s92 = ssub.s32 %s16, %s23
      %p93 = scmp.eq.s32.totalorder %s92, 0
      %s95 = sadd.s32 %s94, 1
      %s96 = scalar_select %p93, %s94, %s95
      %p99 = pneg %p93
      %p100 = scmp.eq.s32.totalorder %s16, 1
      %p101 = por %p99, %p100
      %p102 = scmp.ne.s32.totalorder %s94, %s97
      %p103 = scmp.eq.s32.totalorder %s16, 0
      %p104 = por %p102, %p103
      %p105 = scmp.ne.s32.totalorder %s94, %s97
      %p106 = scmp.eq.s32.totalorder %s21, 1
      %p107 = por %p105, %p106
      %p108 = scmp.ne.s32.totalorder %s97, %s98
      %p109 = scmp.eq.s32.totalorder %s21, 0
      %p110 = por %p108, %p109
      %p111 = scmp.ne.s32.totalorder %s97, %s98
      %p112 = scmp.eq.s32.totalorder %s22, 1
      %p113 = por %p111, %p112
      %p115 = scmp.ne.s32.totalorder %s98, %s114
      %p116 = scmp.eq.s32.totalorder %s22, 0
      %p117 = por %p115, %p116
      %p118 = scmp.le.s32.totalorder 1, %s16
      %p119 = scmp.lt.s32.totalorder %s16, 3
      %p120 = pnand %p118, %p119
      %p121 = pneg %p120
      // Predicated region
      $region9: #{tpu_custom_call.1} parent=5 // pred_check
        _
      $region10: #{tpu_custom_call.1} parent=5 // pred_check_branch
        %123 = sbr.rel (%p120) target = $region12
      $region11: #{tpu_custom_call.1} parent=5 // pred_region
        %s124 = ssub.s32 %s16, 1
        // Predicated region
        $region13: #{tpu_custom_call.1} parent=11 // pred_check
          %p125 = pneg %p63
        $region14: #{tpu_custom_call.1} parent=11 // pred_check_branch
          %127 = sbr.rel (%p125) target = $region16
        $region15: #{tpu_custom_call.1} parent=11 // pred_region
          %s129 = ssub.s32 4096, 4096
          %130 = vsyncadd [#allocation6], %s129
          %s131 = sshll.u32 [#allocation5], 4
          %s132 = int_to_ptr.vmem [resolvable:$true] %s131
          %137 = dma.hbm_to_vmem [thread:$0]  %s1, 4096, %s132, [#allocation6], 128, 128, 8
        $region16: #{tpu_custom_call.1} parent=11 // pred_fallthru
          _
        // Predicated region
        $region17: #{tpu_custom_call.1} parent=11 // pred_check
          %p138 = pneg %p84
        $region18: #{tpu_custom_call.1} parent=11 // pred_check_branch
          %140 = sbr.rel (%p138) target = $region20
        $region19: #{tpu_custom_call.1} parent=11 // pred_region
          _
        $region20: #{tpu_custom_call.1} parent=11 // pred_fallthru
          _
      $region12: #{tpu_custom_call.1} parent=5 // pred_fallthru
        _
      %p141 = scmp.lt.s32.totalorder %s16, 2
      // Predicated region
      $region21: #{tpu_custom_call.1} parent=5 // pred_check
        %p142 = pneg %p141
      $region22: #{tpu_custom_call.1} parent=5 // pred_check_branch
        %144 = sbr.rel (%p142) target = $region24
      $region23: #{tpu_custom_call.1} parent=5 // pred_region
        // Predicated region
        $region25: #{tpu_custom_call.1} parent=23 // pred_check
          %p145 = pneg %p36
        $region26: #{tpu_custom_call.1} parent=23 // pred_check_branch
          %147 = sbr.rel (%p145) target = $region28
        $region27: #{tpu_custom_call.1} parent=23 // pred_region
          %s148 = sand.u32 %s26, 1
          %s149 = scalar_lea.sflag [#allocation3], %s148
          %s150 = sand.u32 %s26, 1
          %s151 = smul.addr %s150, 256
          %s152 = scalar_lea.vmem [#allocation2], %s151
          %s153 = smul.u32 16, %s16
          %s155 = ssub.s32 4096, 4096
          %156 = vsyncadd %s149, %s155
          %s157 = smul.addr %s153, 2
          %s158 = smul.addr %s157, 128
          %s159 = scalar_lea.hbm %s0, %s158
          %s160 = sshll.u32 %s152, 4
          %s161 = int_to_ptr.vmem [resolvable:$true] %s160
          %166 = dma.hbm_to_vmem [thread:$0]  %s159, 4096, %s161, %s149, 256, 256, 16
        $region28: #{tpu_custom_call.1} parent=23 // pred_fallthru
          _
      $region24: #{tpu_custom_call.1} parent=5 // pred_fallthru
        _
      %p167 = scmp.le.s32.totalorder 1, %s16
      %p168 = scmp.lt.s32.totalorder %s16, 3
      %p169 = pnand %p167, %p168
      %p170 = pneg %p169
      // Predicated region
      $region29: #{tpu_custom_call.1} parent=5 // pred_check
        _
      $region30: #{tpu_custom_call.1} parent=5 // pred_check_branch
        %172 = sbr.rel (%p169) target = $region32
      $region31: #{tpu_custom_call.1} parent=5 // pred_region
        %s173 = ssub.s32 %s16, 1
        %s174 = sand.u32 %s29, 1
        %s175 = scalar_lea.sflag [#allocation3], %s174
        %s176 = sand.u32 %s29, 1
        %s177 = smul.addr %s176, 256
        %s178 = scalar_lea.vmem [#allocation2], %s177
        // Predicated region
        $region33: #{tpu_custom_call.1} parent=31 // pred_check
          %p179 = pneg %p42
        $region34: #{tpu_custom_call.1} parent=31 // pred_check_branch
          %181 = sbr.rel (%p179) target = $region36
        $region35: #{tpu_custom_call.1} parent=31 // pred_region
          %182 = dma.done %s175, 4096
        $region36: #{tpu_custom_call.1} parent=31 // pred_fallthru
          _
        // Predicated region
        $region37: #{tpu_custom_call.1} parent=31 // pred_check
          %p183 = pneg %p63
        $region38: #{tpu_custom_call.1} parent=31 // pred_check_branch
          %185 = sbr.rel (%p183) target = $region40
        $region39: #{tpu_custom_call.1} parent=31 // pred_region
          %186 = dma.done [#allocation6], 4096
        $region40: #{tpu_custom_call.1} parent=31 // pred_fallthru
          _
        %s187 = sand.u32 %s29, 1
        %s188 = scalar_lea.sflag [#allocation3], %s187
        %s189 = sand.u32 %s29, 1
        %s190 = smul.addr %s189, 256
        %s191 = scalar_lea.vmem [#allocation2], %s190
        %p192 = pneg %p42
        %p193 = pneg %p39
        %p194 = pneg %p63
        %p195 = pneg %p60
        %p196 = pneg %p84
        %p197 = pneg %p81
        %p198 = pneg %p110
        %p199 = pneg %p107
        %s200 = sand.u32 %s97, 1
        %s201 = scalar_lea.sflag [#allocation4], %s200
        %s202 = sand.u32 %s97, 1
        %s203 = smul.addr %s202, 128
        %s204 = scalar_lea.vmem [#allocation7], %s203
        %s205 = smul.u32 16, %s21
        %s206 = smul.u32 16, %s21
        %v207 = vld [vmem:[%s178] sm:$0xff]
        %v208 = vld [vmem:[%s178 + $0x8] sm:$0xff]
        %v209 = vld [vmem:[%s178 + $0x10] sm:$0xff]
        %v210 = vld [vmem:[%s178 + $0x18] sm:$0xff]
        %v211 = vld [vmem:[%s178 + $0x20] sm:$0xff]
        %v212 = vld [vmem:[%s178 + $0x28] sm:$0xff]
        %v213 = vld [vmem:[%s178 + $0x30] sm:$0xff]
        %v214 = vld [vmem:[%s178 + $0x38] sm:$0xff]
        %v215 = vld [vmem:[%s178 + $0x40] sm:$0xff]
        %v216 = vld [vmem:[%s178 + $0x48] sm:$0xff]
        %v217 = vld [vmem:[%s178 + $0x50] sm:$0xff]
        %v218 = vld [vmem:[%s178 + $0x58] sm:$0xff]
        %v219 = vld [vmem:[%s178 + $0x60] sm:$0xff]
        %v220 = vld [vmem:[%s178 + $0x68] sm:$0xff]
        %v221 = vld [vmem:[%s178 + $0x70] sm:$0xff]
        %v222 = vld [vmem:[%s178 + $0x78] sm:$0xff]
        %v223 = vld [vmem:[%s178 + $0x80] sm:$0xff]
        %v224 = vld [vmem:[%s178 + $0x88] sm:$0xff]
        %v225 = vld [vmem:[%s178 + $0x90] sm:$0xff]
        %v226 = vld [vmem:[%s178 + $0x98] sm:$0xff]
        %v227 = vld [vmem:[%s178 + $0xa0] sm:$0xff]
        %v228 = vld [vmem:[%s178 + $0xa8] sm:$0xff]
        %v229 = vld [vmem:[%s178 + $0xb0] sm:$0xff]
        %v230 = vld [vmem:[%s178 + $0xb8] sm:$0xff]
        %v231 = vld [vmem:[%s178 + $0xc0] sm:$0xff]
        %v232 = vld [vmem:[%s178 + $0xc8] sm:$0xff]
        %v233 = vld [vmem:[%s178 + $0xd0] sm:$0xff]
        %v234 = vld [vmem:[%s178 + $0xd8] sm:$0xff]
        %v235 = vld [vmem:[%s178 + $0xe0] sm:$0xff]
        %v236 = vld [vmem:[%s178 + $0xe8] sm:$0xff]
        %v237 = vld [vmem:[%s178 + $0xf0] sm:$0xff]
        %v238 = vld [vmem:[%s178 + $0xf8] sm:$0xff]
        %v239 = vpack.c.bf16 %v209, %v207
        %v240 = vpack.c.bf16 %v210, %v208
        %v241 = vpack.c.bf16 %v213, %v211
        %v242 = vpack.c.bf16 %v214, %v212
        %v243 = vpack.c.bf16 %v217, %v215
        %v244 = vpack.c.bf16 %v218, %v216
        %v245 = vpack.c.bf16 %v221, %v219
        %v246 = vpack.c.bf16 %v222, %v220
        %v247 = vpack.c.bf16 %v225, %v223
        %v248 = vpack.c.bf16 %v226, %v224
        %v249 = vpack.c.bf16 %v229, %v227
        %v250 = vpack.c.bf16 %v230, %v228
        %v251 = vpack.c.bf16 %v233, %v231
        %v252 = vpack.c.bf16 %v234, %v232
        %v253 = vpack.c.bf16 %v237, %v235
        %v254 = vpack.c.bf16 %v238, %v236
        %v255 = vld [vmem:[#allocation5] sm:$0xff]
        %v256 = vld [vmem:[#allocation5 + $0x8] sm:$0xff]
        %v257 = vld [vmem:[#allocation5 + $0x10] sm:$0xff]
        %v258 = vld [vmem:[#allocation5 + $0x18] sm:$0xff]
        %v259 = vld [vmem:[#allocation5 + $0x20] sm:$0xff]
        %v260 = vld [vmem:[#allocation5 + $0x28] sm:$0xff]
        %v261 = vld [vmem:[#allocation5 + $0x30] sm:$0xff]
        %v262 = vld [vmem:[#allocation5 + $0x38] sm:$0xff]
        %v263 = vld [vmem:[#allocation5 + $0x40] sm:$0xff]
        %v264 = vld [vmem:[#allocation5 + $0x48] sm:$0xff]
        %v265 = vld [vmem:[#allocation5 + $0x50] sm:$0xff]
        %v266 = vld [vmem:[#allocation5 + $0x58] sm:$0xff]
        %v267 = vld [vmem:[#allocation5 + $0x60] sm:$0xff]
        %v268 = vld [vmem:[#allocation5 + $0x68] sm:$0xff]
        %v269 = vld [vmem:[#allocation5 + $0x70] sm:$0xff]
        %v270 = vld [vmem:[#allocation5 + $0x78] sm:$0xff]
        %v271 = vld [vmem:[#allocation5 + $0x80] sm:$0xff]
        %v272 = vld [vmem:[#allocation5 + $0x88] sm:$0xff]
        %v273 = vld [vmem:[#allocation5 + $0x90] sm:$0xff]
        %v274 = vld [vmem:[#allocation5 + $0x98] sm:$0xff]
        %v275 = vld [vmem:[#allocation5 + $0xa0] sm:$0xff]
        %v276 = vld [vmem:[#allocation5 + $0xa8] sm:$0xff]
        %v277 = vld [vmem:[#allocation5 + $0xb0] sm:$0xff]
        %v278 = vld [vmem:[#allocation5 + $0xb8] sm:$0xff]
        %v279 = vld [vmem:[#allocation5 + $0xc0] sm:$0xff]
        %v280 = vld [vmem:[#allocation5 + $0xc8] sm:$0xff]
        %v281 = vld [vmem:[#allocation5 + $0xd0] sm:$0xff]
        %v282 = vld [vmem:[#allocation5 + $0xd8] sm:$0xff]
        %v283 = vld [vmem:[#allocation5 + $0xe0] sm:$0xff]
        %v284 = vld [vmem:[#allocation5 + $0xe8] sm:$0xff]
        %v285 = vld [vmem:[#allocation5 + $0xf0] sm:$0xff]
        %v286 = vld [vmem:[#allocation5 + $0xf8] sm:$0xff]
        %v287 = vld [vmem:[%s2] sm:$0x3]
        %v289 = vlaneseq
        %v290 = vshrl.u32 %v289, 7
        %v291 = vsub.s32 0, %v290
        %v292 = vrot.slane %v287, %v291
        %v293 = vlaneseq
        %v294 = vshrl.u32 %v293, 7
        %v295 = vsub.s32 1, %v294
        %v296 = vrot.slane %v287, %v295
        %v331 = vunpack.c.l.b16 %v255
        %v332 = vunpack.c.h.b16 %v255
        %v333 = vunpack.c.l.b16 %v256
        %v334 = vunpack.c.h.b16 %v256
        %v335 = vunpack.c.l.b16 %v257
        %v336 = vunpack.c.h.b16 %v257
        %v337 = vunpack.c.l.b16 %v258
        %v338 = vunpack.c.h.b16 %v258
        %v339 = vunpack.c.l.b16 %v259
        %v340 = vunpack.c.h.b16 %v259
        %v341 = vunpack.c.l.b16 %v260
        %v342 = vunpack.c.h.b16 %v260
        %v343 = vunpack.c.l.b16 %v261
        %v344 = vunpack.c.h.b16 %v261
        %v345 = vunpack.c.l.b16 %v262
        %v346 = vunpack.c.h.b16 %v262
        %v347 = vunpack.c.l.b16 %v263
        %v348 = vunpack.c.h.b16 %v263
        %v349 = vunpack.c.l.b16 %v264
        %v350 = vunpack.c.h.b16 %v264
        %v351 = vunpack.c.l.b16 %v265
        %v352 = vunpack.c.h.b16 %v265
        %v353 = vunpack.c.l.b16 %v266
        %v354 = vunpack.c.h.b16 %v266
        %v355 = vunpack.c.l.b16 %v267
        %v356 = vunpack.c.h.b16 %v267
        %v357 = vunpack.c.l.b16 %v268
        %v358 = vunpack.c.h.b16 %v268
        %v359 = vunpack.c.l.b16 %v269
        %v360 = vunpack.c.h.b16 %v269
        %v361 = vunpack.c.l.b16 %v270
        %v362 = vunpack.c.h.b16 %v270
        %v363 = vunpack.c.l.b16 %v271
        %v364 = vunpack.c.h.b16 %v271
        %v365 = vunpack.c.l.b16 %v272
        %v366 = vunpack.c.h.b16 %v272
        %v367 = vunpack.c.l.b16 %v273
        %v368 = vunpack.c.h.b16 %v273
        %v369 = vunpack.c.l.b16 %v274
        %v370 = vunpack.c.h.b16 %v274
        %v371 = vunpack.c.l.b16 %v275
        %v372 = vunpack.c.h.b16 %v275
        %v373 = vunpack.c.l.b16 %v276
        %v374 = vunpack.c.h.b16 %v276
        %v375 = vunpack.c.l.b16 %v277
        %v376 = vunpack.c.h.b16 %v277
        %v377 = vunpack.c.l.b16 %v278
        %v378 = vunpack.c.h.b16 %v278
        %v379 = vunpack.c.l.b16 %v279
        %v380 = vunpack.c.h.b16 %v279
        %v381 = vunpack.c.l.b16 %v280
        %v382 = vunpack.c.h.b16 %v280
        %v383 = vunpack.c.l.b16 %v281
        %v384 = vunpack.c.h.b16 %v281
        %v385 = vunpack.c.l.b16 %v282
        %v386 = vunpack.c.h.b16 %v282
        %v387 = vunpack.c.l.b16 %v283
        %v388 = vunpack.c.h.b16 %v283
        %v389 = vunpack.c.l.b16 %v284
        %v390 = vunpack.c.h.b16 %v284
        %v391 = vunpack.c.l.b16 %v285
        %v392 = vunpack.c.h.b16 %v285
        %v393 = vunpack.c.l.b16 %v286
        %v394 = vunpack.c.h.b16 %v286
        %v395 = vpack.c.b16 %v333, %v331
        %v396 = vpack.c.b16 %v334, %v332
        %v397 = vpack.c.b16 %v337, %v335
        %v398 = vpack.c.b16 %v338, %v336
        %v399 = vpack.c.b16 %v341, %v339
        %v400 = vpack.c.b16 %v342, %v340
        %v401 = vpack.c.b16 %v345, %v343
        %v402 = vpack.c.b16 %v346, %v344
        %v403 = vpack.c.b16 %v349, %v347
        %v404 = vpack.c.b16 %v350, %v348
        %v405 = vpack.c.b16 %v353, %v351
        %v406 = vpack.c.b16 %v354, %v352
        %v407 = vpack.c.b16 %v357, %v355
        %v408 = vpack.c.b16 %v358, %v356
        %v409 = vpack.c.b16 %v361, %v359
        %v410 = vpack.c.b16 %v362, %v360
        %v411 = vpack.c.b16 %v365, %v363
        %v412 = vpack.c.b16 %v366, %v364
        %v413 = vpack.c.b16 %v369, %v367
        %v414 = vpack.c.b16 %v370, %v368
        %v415 = vpack.c.b16 %v373, %v371
        %v416 = vpack.c.b16 %v374, %v372
        %v417 = vpack.c.b16 %v377, %v375
        %v418 = vpack.c.b16 %v378, %v376
        %v419 = vpack.c.b16 %v381, %v379
        %v420 = vpack.c.b16 %v382, %v380
        %v421 = vpack.c.b16 %v385, %v383
        %v422 = vpack.c.b16 %v386, %v384
        %v423 = vpack.c.b16 %v389, %v387
        %v424 = vpack.c.b16 %v390, %v388
        %v425 = vpack.c.b16 %v393, %v391
        %v426 = vpack.c.b16 %v394, %v392
        %459 = vmatprep.subr.bf16.mxu0 %v396
        %460 = vmatpush1.bf16.msra.mxu0 %v395
        %461 = vmatprep.subr.bf16.mxu0 %v398
        %462 = vmatpush1.bf16.msra.mxu0 %v397
        %463 = vmatprep.subr.bf16.mxu0 %v400
        %464 = vmatpush1.bf16.msra.mxu0 %v399
        %465 = vmatprep.subr.bf16.mxu0 %v402
        %466 = vmatpush1.bf16.msra.mxu0 %v401
        %467 = vmatprep.subr.bf16.mxu0 %v404
        %468 = vmatpush1.bf16.msra.mxu0 %v403
        %469 = vmatprep.subr.bf16.mxu0 %v406
        %470 = vmatpush1.bf16.msra.mxu0 %v405
        %471 = vmatprep.subr.bf16.mxu0 %v408
        %472 = vmatpush1.bf16.msra.mxu0 %v407
        %473 = vmatprep.subr.bf16.mxu0 %v410
        %474 = vmatpush1.bf16.msra.mxu0 %v409
        %475 = vmatprep.subr.bf16.mxu0 %v412
        %476 = vmatpush1.bf16.msra.mxu0 %v411
        %477 = vmatprep.subr.bf16.mxu0 %v414
        %478 = vmatpush1.bf16.msra.mxu0 %v413
        %479 = vmatprep.subr.bf16.mxu0 %v416
        %480 = vmatpush1.bf16.msra.mxu0 %v415
        %481 = vmatprep.subr.bf16.mxu0 %v418
        %482 = vmatpush1.bf16.msra.mxu0 %v417
        %483 = vmatprep.subr.bf16.mxu0 %v420
        %484 = vmatpush1.bf16.msra.mxu0 %v419
        %485 = vmatprep.subr.bf16.mxu0 %v422
        %486 = vmatpush1.bf16.msra.mxu0 %v421
        %487 = vmatprep.subr.bf16.mxu0 %v424
        %488 = vmatpush1.bf16.msra.mxu0 %v423
        %489 = vmatprep.subr.bf16.mxu0 %v426
        %490 = vmatpush1.bf16.msra.mxu0 %v425
        %491 = vmatprep.mubr.bf16.mxu0 %v240
        %492 = vmatmul.mubr.bf16.gmra.mrb[0].mxu0 %v239
        %v493 = vpop.f32.mrb[0].mxu0
        %v494 = vadd.f32 %v292, %v493
        %v495 = vpop.f32.mrb[0].mxu0
        %v496 = vadd.f32 %v296, %v495
        %v497 = vpop.f32.mrb[0].mxu0
        %v498 = vadd.f32 %v292, %v497
        %v499 = vpop.f32.mrb[0].mxu0
        %v500 = vadd.f32 %v296, %v499
        %501 = vmatprep.mubr.bf16.mxu0 %v242
        %502 = vmatmul.mubr.bf16.gmra.mrb[0].mxu0 %v241
        %v503 = vpop.f32.mrb[0].mxu0
        %v504 = vadd.f32 %v292, %v503
        %v505 = vpop.f32.mrb[0].mxu0
        %v506 = vadd.f32 %v296, %v505
        %v507 = vpop.f32.mrb[0].mxu0
        %v508 = vadd.f32 %v292, %v507
        %v509 = vpop.f32.mrb[0].mxu0
        %v510 = vadd.f32 %v296, %v509
        %511 = vmatprep.mubr.bf16.mxu0 %v244
        %512 = vmatmul.mubr.bf16.gmra.mrb[0].mxu0 %v243
        %v513 = vpop.f32.mrb[0].mxu0
        %v514 = vadd.f32 %v292, %v513
        %v515 = vpop.f32.mrb[0].mxu0
        %v516 = vadd.f32 %v296, %v515
        %v517 = vpop.f32.mrb[0].mxu0
        %v518 = vadd.f32 %v292, %v517
        %v519 = vpop.f32.mrb[0].mxu0
        %v520 = vadd.f32 %v296, %v519
        %521 = vmatprep.mubr.bf16.mxu0 %v246
        %522 = vmatmul.mubr.bf16.gmra.mrb[0].mxu0 %v245
        %v523 = vpop.f32.mrb[0].mxu0
        %v524 = vadd.f32 %v292, %v523
        %v525 = vpop.f32.mrb[0].mxu0
        %v526 = vadd.f32 %v296, %v525
        %v527 = vpop.f32.mrb[0].mxu0
        %v528 = vadd.f32 %v292, %v527
        %v529 = vpop.f32.mrb[0].mxu0
        %v530 = vadd.f32 %v296, %v529
        %531 = vmatprep.mubr.bf16.mxu0 %v248
        %532 = vmatmul.mubr.bf16.gmra.mrb[0].mxu0 %v247
        %v533 = vpop.f32.mrb[0].mxu0
        %v534 = vadd.f32 %v292, %v533
        %v535 = vpop.f32.mrb[0].mxu0
        %v536 = vadd.f32 %v296, %v535
        %v537 = vpop.f32.mrb[0].mxu0
        %v538 = vadd.f32 %v292, %v537
        %v539 = vpop.f32.mrb[0].mxu0
        %v540 = vadd.f32 %v296, %v539
        %541 = vmatprep.mubr.bf16.mxu0 %v250
        %542 = vmatmul.mubr.bf16.gmra.mrb[0].mxu0 %v249
        %v543 = vpop.f32.mrb[0].mxu0
        %v544 = vadd.f32 %v292, %v543
        %v545 = vpop.f32.mrb[0].mxu0
        %v546 = vadd.f32 %v296, %v545
        %v547 = vpop.f32.mrb[0].mxu0
        %v548 = vadd.f32 %v292, %v547
        %v549 = vpop.f32.mrb[0].mxu0
        %v550 = vadd.f32 %v296, %v549
        %551 = vmatprep.mubr.bf16.mxu0 %v252
        %552 = vmatmul.mubr.bf16.gmra.mrb[0].mxu0 %v251
        %v553 = vpop.f32.mrb[0].mxu0
        %v554 = vadd.f32 %v292, %v553
        %v555 = vpop.f32.mrb[0].mxu0
        %v556 = vadd.f32 %v296, %v555
        %v557 = vpop.f32.mrb[0].mxu0
        %v558 = vadd.f32 %v292, %v557
        %v559 = vpop.f32.mrb[0].mxu0
        %v560 = vadd.f32 %v296, %v559
        %561 = vmatprep.mubr.bf16.mxu0 %v254
        %562 = vmatmul.mubr.bf16.gmra.mrb[0].mxu0 %v253
        %v563 = vpop.f32.mrb[0].mxu0
        %v564 = vadd.f32 %v292, %v563
        %v565 = vpop.f32.mrb[0].mxu0
        %v566 = vadd.f32 %v296, %v565
        %v567 = vpop.f32.mrb[0].mxu0
        %v568 = vadd.f32 %v292, %v567
        %v569 = vpop.f32.mrb[0].mxu0
        %v570 = vadd.f32 %v296, %v569
        %571 = vdwg.mxu0
        %v572 = vtanh.pop %v494
        %v573 = vtanh.pop %v498
        %v574 = vtanh.pop %v504
        %v575 = vtanh.pop %v508
        %v576 = vtanh.pop %v514
        %v577 = vtanh.pop %v518
        %v578 = vtanh.pop %v524
        %v579 = vtanh.pop %v528
        %v580 = vtanh.pop %v534
        %v581 = vtanh.pop %v538
        %v582 = vtanh.pop %v544
        %v583 = vtanh.pop %v548
        %v584 = vtanh.pop %v554
        %v585 = vtanh.pop %v558
        %v586 = vtanh.pop %v564
        %v587 = vtanh.pop %v568
        %v588 = vmul.f32 %v496, 0.01
        %v589 = vmul.f32 %v500, 0.01
        %v590 = vmul.f32 %v506, 0.01
        %v591 = vmul.f32 %v510, 0.01
        %v592 = vmul.f32 %v516, 0.01
        %v593 = vmul.f32 %v520, 0.01
        %v594 = vmul.f32 %v526, 0.01
        %v595 = vmul.f32 %v530, 0.01
        %v596 = vmul.f32 %v536, 0.01
        %v597 = vmul.f32 %v540, 0.01
        %v598 = vmul.f32 %v546, 0.01
        %v599 = vmul.f32 %v550, 0.01
        %v600 = vmul.f32 %v556, 0.01
        %v601 = vmul.f32 %v560, 0.01
        %v602 = vmul.f32 %v566, 0.01
        %v603 = vmul.f32 %v570, 0.01
        %v604 = vmax.f32 %v496, %v588
        %v605 = vmax.f32 %v500, %v589
        %v606 = vmax.f32 %v506, %v590
        %v607 = vmax.f32 %v510, %v591
        %v608 = vmax.f32 %v516, %v592
        %v609 = vmax.f32 %v520, %v593
        %v610 = vmax.f32 %v526, %v594
        %v611 = vmax.f32 %v530, %v595
        %v612 = vmax.f32 %v536, %v596
        %v613 = vmax.f32 %v540, %v597
        %v614 = vmax.f32 %v546, %v598
        %v615 = vmax.f32 %v550, %v599
        %v616 = vmax.f32 %v556, %v600
        %v617 = vmax.f32 %v560, %v601
        %v618 = vmax.f32 %v566, %v602
        %v619 = vmax.f32 %v570, %v603
        %v620 = vmul.f32 %v572, %v604
        %v621 = vmul.f32 %v573, %v605
        %v622 = vmul.f32 %v574, %v606
        %v623 = vmul.f32 %v575, %v607
        %v624 = vmul.f32 %v576, %v608
        %v625 = vmul.f32 %v577, %v609
        %v626 = vmul.f32 %v578, %v610
        %v627 = vmul.f32 %v579, %v611
        %v628 = vmul.f32 %v580, %v612
        %v629 = vmul.f32 %v581, %v613
        %v630 = vmul.f32 %v582, %v614
        %v631 = vmul.f32 %v583, %v615
        %v632 = vmul.f32 %v584, %v616
        %v633 = vmul.f32 %v585, %v617
        %v634 = vmul.f32 %v586, %v618
        %v635 = vmul.f32 %v587, %v619
        %636 = vst [vmem:[%s204] sm:$0xff] %v620
        %637 = vst [vmem:[%s204 + $0x8] sm:$0xff] %v621
        %638 = vst [vmem:[%s204 + $0x10] sm:$0xff] %v622
        %639 = vst [vmem:[%s204 + $0x18] sm:$0xff] %v623
        %640 = vst [vmem:[%s204 + $0x20] sm:$0xff] %v624
        %641 = vst [vmem:[%s204 + $0x28] sm:$0xff] %v625
        %642 = vst [vmem:[%s204 + $0x30] sm:$0xff] %v626
        %643 = vst [vmem:[%s204 + $0x38] sm:$0xff] %v627
        %644 = vst [vmem:[%s204 + $0x40] sm:$0xff] %v628
        %645 = vst [vmem:[%s204 + $0x48] sm:$0xff] %v629
        %646 = vst [vmem:[%s204 + $0x50] sm:$0xff] %v630
        %647 = vst [vmem:[%s204 + $0x58] sm:$0xff] %v631
        %648 = vst [vmem:[%s204 + $0x60] sm:$0xff] %v632
        %649 = vst [vmem:[%s204 + $0x68] sm:$0xff] %v633
        %650 = vst [vmem:[%s204 + $0x70] sm:$0xff] %v634
        %651 = vst [vmem:[%s204 + $0x78] sm:$0xff] %v635
        %s652 = sand.u32 %s97, 1
        %s653 = scalar_lea.sflag [#allocation4], %s652
        %s654 = sand.u32 %s97, 1
        %s655 = smul.addr %s654, 128
        %s656 = scalar_lea.vmem [#allocation7], %s655
        // Predicated region
        $region41: #{tpu_custom_call.1} parent=31 // pred_check
          %p657 = pneg %p107
        $region42: #{tpu_custom_call.1} parent=31 // pred_check_branch
          %659 = sbr.rel (%p657) target = $region44
        $region43: #{tpu_custom_call.1} parent=31 // pred_region
          %s660 = smul.u32 16, %s21
          %s662 = ssub.s32 2048, 2048
          %663 = vsyncadd %s653, %s662
          %s664 = smul.addr %s660, 128
          %s665 = scalar_lea.hbm %s3, %s664
          %s666 = sshll.u32 %s656, 4
          %s667 = int_to_ptr.vmem [resolvable:$true] %s666
          %672 = dma.vmem_to_hbm [thread:$0]  %s667, 2048, %s665, %s653, 128, 128, 8
        $region44: #{tpu_custom_call.1} parent=31 // pred_fallthru
          _
      $region32: #{tpu_custom_call.1} parent=5 // pred_fallthru
        _
      %p673 = scmp.le.s32.totalorder 2, %s16
      // Predicated region
      $region45: #{tpu_custom_call.1} parent=5 // pred_check
        %p674 = pneg %p673
      $region46: #{tpu_custom_call.1} parent=5 // pred_check_branch
        %676 = sbr.rel (%p674) target = $region48
      $region47: #{tpu_custom_call.1} parent=5 // pred_region
        %s677 = ssub.s32 %s16, 2
        // Predicated region
        $region49: #{tpu_custom_call.1} parent=47 // pred_check
          %p678 = pneg %p113
        $region50: #{tpu_custom_call.1} parent=47 // pred_check_branch
          %680 = sbr.rel (%p678) target = $region52
        $region51: #{tpu_custom_call.1} parent=47 // pred_region
          %s681 = sand.u32 %s98, 1
          %s682 = scalar_lea.sflag [#allocation4], %s681
          %s683 = sand.u32 %s98, 1
          %s684 = smul.addr %s683, 128
          %s685 = scalar_lea.vmem [#allocation7], %s684
          %686 = dma.done %s682, 2048
        $region52: #{tpu_custom_call.1} parent=47 // pred_fallthru
          _
      $region48: #{tpu_custom_call.1} parent=5 // pred_fallthru
        _
    $region6: #{tpu_custom_call.1} parent=1 // loop_footer
      %s20 = sadd.s32 1, %s16
    $region7: #{tpu_custom_call.1} parent=1 // loop_footer_branch
      %15 = sbr.rel target = $region3
    $region8: #{tpu_custom_call.1} parent=1 // loop_exit
      _
    %687 = vsyncpa [#allocation3], 1
    %s688 = scalar_lea.sflag [#allocation3], 1
    %689 = vsyncpa %s688, 1
    %690 = vsyncpa [#allocation6], 1
    %691 = vsyncpa [#allocation4], 1
    %s692 = scalar_lea.sflag [#allocation4], 1
    %693 = vsyncpa %s692, 1

</llo_original>
